<compile_context>
chip_gen: v7x
topology: tpu7x:2x2x1
jax: 0.10.0
libtpu: 0.0.40
codegen_flags: <defaults>
</compile_context>

<pallas_src>
from functools import partial

import jax
import jax.numpy as jnp
from jax.experimental import pallas as pl
from jax.experimental.pallas import tpu as pltpu


# ---------------------------------------------------------------------------
# Kernel body
# ---------------------------------------------------------------------------
def _sdpa_kernel(q_ref, k_ref, v_ref, out_ref, *attn_refs, inv_temperature):
    # Each ref holds a batch tile: (Bt, L, D).
    q = q_ref[...]
    k = k_ref[...]
    v = v_ref[...]

    # scores = q @ k^T — batched MXU matmul contracting the last dims of both
    # operands directly (no explicit transpose / cross-lane shuffle).
    scores = jnp.einsum(
        "bqd,bkd->bqk", q, k, preferred_element_type=jnp.float32
    )  # (Bt, Lq, Lk), f32 accumulation

    # Apply temperature on the f32 scores — numerically matches the reference
    # `attn / temperature` regardless of the input dtype.
    scores = scores * jnp.float32(inv_temperature)

    # Numerically-stable softmax over the last axis, math kept in f32.
    m = jnp.max(scores, axis=-1, keepdims=True)
    e = jnp.exp(scores - m)
    denom = jnp.sum(e, axis=-1, keepdims=True)
    attn = e / denom  # exact normalization (rows sum to 1 to f32 precision)

    if attn_refs:  # attn writeback is optional (return_attn=False skips it)
        attn_refs[0][...] = attn.astype(attn_refs[0].dtype)

    out = jnp.einsum(
        "bqk,bkd->bqd", attn.astype(v.dtype), v,
        preferred_element_type=jnp.float32,
    )
    out_ref[...] = out.astype(out_ref.dtype)


# ---------------------------------------------------------------------------
# Generation-aware, padding-aware tile sizing
# ---------------------------------------------------------------------------
_LANE = 128


def _round_up(x, m):
    return ((x + m - 1) // m) * m


def _sublane_multiple(itemsize):
    # (8, 128) tile for 32-bit; narrower dtypes pack along sublanes.
    return max(8, 32 // max(int(itemsize), 1))


def _padded_tile_bytes(rows, cols, itemsize):
    """Physical VMEM bytes of a (rows, cols) slab after (sublane, lane) tiling."""
    itemsize = int(itemsize)
    return (_round_up(max(rows, 1), _sublane_multiple(itemsize))
            * _round_up(max(cols, 1), _LANE) * itemsize)


def _vmem_capacity_bytes(default=64 * 1024 * 1024):
    try:
        return int(pltpu.get_tpu_info().vmem_capacity_bytes)
    except Exception:
        # Conservative fallback (v7x-sized) if the query is unavailable.
        return default


def _pick_batch_tile(B, Lq, Lk, Dk, Dv, itemsize, with_attn, vmem_capacity):
    """Largest divisor Bt of B whose double-buffered, padding-aware working
    set fits in ~half of this generation's VMEM, while keeping >= 2 grid steps
    whenever possible (pipeline overlap; v7x megacore sharding)."""
    budget = vmem_capacity // 2
    f32 = 4
    # Per-batch-element physical VMEM bytes of the pipelined I/O buffers.
    io = (_padded_tile_bytes(Lq, Dk, itemsize)      # q
          + _padded_tile_bytes(Lk, Dk, itemsize)    # k
          + _padded_tile_bytes(Lk, Dv, itemsize)    # v
          + _padded_tile_bytes(Lq, Dv, itemsize))   # out
    if with_attn:
        io += _padded_tile_bytes(Lq, Lk, itemsize)  # attn
    # In-kernel f32 intermediates (scores / exp slabs + f32 output accumulator).
    scratch = 2 * _padded_tile_bytes(Lq, Lk, f32) + _padded_tile_bytes(Lq, Dv, f32)
    per_batch = 2 * io + scratch                    # x2: double-buffered pipeline

    cap = max(1, budget // max(per_batch, 1))
    if B >= 2:
        cap = min(cap, B // 2)   # >= 2 grid steps: pipeline + 2 TCs on v7x
    cap = int(min(cap, B))

    bt = 1
    for cand in range(1, cap + 1):
        if B % cand == 0:
            bt = cand
    return bt


# ---------------------------------------------------------------------------
# Wrapper
# ---------------------------------------------------------------------------
def scaled_dot_product_attention(q, k, v, temperature, *, return_attn=True):
    """Pallas implementation of ScaledDotProductAttention.forward (eval mode).

    Returns (output, attn) like the PyTorch module (or just output when
    return_attn=False, which halves/removes the dominant attn HBM writeback).
    """
    B, Lq, Dk = q.shape
    _, Lk, Dk2 = k.shape
    _, _, Dv = v.shape
    assert Dk == Dk2 and k.shape[0] == B and v.shape[0] == B and v.shape[1] == Lk

    vmem_cap = _vmem_capacity_bytes()
    Bt = _pick_batch_tile(B, Lq, Lk, Dk, Dv, q.dtype.itemsize, return_attn, vmem_cap)

    kernel = partial(_sdpa_kernel, inv_temperature=1.0 / float(temperature))

    out_shapes = [jax.ShapeDtypeStruct((B, Lq, Dv), q.dtype)]        # output
    out_specs = [pl.BlockSpec((Bt, Lq, Dv), lambda b: (b, 0, 0))]
    if return_attn:
        out_shapes.append(jax.ShapeDtypeStruct((B, Lq, Lk), q.dtype))  # attn
        out_specs.append(pl.BlockSpec((Bt, Lq, Lk), lambda b: (b, 0, 0)))

    result = pl.pallas_call(
        kernel,
        out_shape=tuple(out_shapes),
        grid_spec=pltpu.PrefetchScalarGridSpec(
            num_scalar_prefetch=0,
            grid=(B // Bt,),
            in_specs=[
                pl.BlockSpec((Bt, Lq, Dk), lambda b: (b, 0, 0)),
                pl.BlockSpec((Bt, Lk, Dk), lambda b: (b, 0, 0)),
                pl.BlockSpec((Bt, Lk, Dv), lambda b: (b, 0, 0)),
            ],
            out_specs=out_specs,
        ),
        compiler_params=pltpu.CompilerParams(
            dimension_semantics=("parallel",),
            # Raise the scoped VMEM limit so the generation-aware batch tile
            # is not silently capped by the 16/32 MiB default.
            vmem_limit_bytes=int(vmem_cap * 0.75),
        ),
    )(q, k, v)

    if return_attn:
        out, attn = result
        return out, attn
    return result[0]


# ---------------------------------------------------------------------------
# Reference + self-test
# ---------------------------------------------------------------------------
def _reference(q, k, v, temperature):
    attn = jnp.einsum("bqd,bkd->bqk", q, k) / temperature
    attn = jax.nn.softmax(attn, axis=2)
    out = jnp.einsum("bqk,bkd->bqd", attn, v)
    return out, attn


if __name__ == "__main__":
    key = jax.random.PRNGKey(0)
    kq, kk, kv = jax.random.split(key, 3)

    B, Lq, Lk, Dk, Dv = 2, 8, 8, 32, 32
    temperature = float(Dk) ** 0.5  # np.power(d_k, 0.5), as in DSANet usage

    q = jax.random.normal(kq, (B, Lq, Dk), dtype=jnp.float32)
    k = jax.random.normal(kk, (B, Lk, Dk), dtype=jnp.float32)
    v = jax.random.normal(kv, (B, Lk, Dv), dtype=jnp.float32)

    out, attn = scaled_dot_product_attention(q, k, v, temperature)
    jax.block_until_ready((out, attn))

    ref_out, ref_attn = _reference(q, k, v, temperature)
    # Tolerance accounts for MXU f32 matmul precision differences vs XLA.
    assert jnp.allclose(out, ref_out, atol=2e-3, rtol=2e-3), "output mismatch"
    assert jnp.allclose(attn, ref_attn, atol=2e-3, rtol=2e-3), "attn mismatch"

    print("KERNEL_OK")
</pallas_src>

<mosaic_0001>
module attributes {stable_mosaic.version = 11 : i64} {
  func.func @_sdpa_kernel(%arg0: i32, %arg1: memref<1x8x32xf32, #tpu.memory_space<vmem>>, %arg2: memref<1x8x32xf32, #tpu.memory_space<vmem>>, %arg3: memref<1x8x32xf32, #tpu.memory_space<vmem>>, %arg4: memref<1x8x32xf32, #tpu.memory_space<vmem>>, %arg5: memref<1x8x8xf32, #tpu.memory_space<vmem>>) attributes {dimension_semantics = [#tpu.dimension_semantics<parallel>], iteration_bounds = array<i64: 2>, scalar_prefetch = 0 : i64, scratch_operands = 0 : i64, tpu.core_type = #tpu.core_type<tc>, window_params = [{transform_indices = @transform_0, window_bounds = array<i64: 1, 8, 32>}, {transform_indices = @transform_1, window_bounds = array<i64: 1, 8, 32>}, {transform_indices = @transform_2, window_bounds = array<i64: 1, 8, 32>}, {transform_indices = @transform_3, window_bounds = array<i64: 1, 8, 32>}, {transform_indices = @transform_4, window_bounds = array<i64: 1, 8, 8>}]} {
    %c0 = arith.constant 0 : index
    %c0_0 = arith.constant 0 : index
    %c0_1 = arith.constant 0 : index
    %0 = vector.load %arg1[%c0, %c0_0, %c0_1] : memref<1x8x32xf32, #tpu.memory_space<vmem>>, vector<1x8x32xf32>
    %c0_2 = arith.constant 0 : index
    %c0_3 = arith.constant 0 : index
    %c0_4 = arith.constant 0 : index
    %1 = vector.load %arg2[%c0_2, %c0_3, %c0_4] : memref<1x8x32xf32, #tpu.memory_space<vmem>>, vector<1x8x32xf32>
    %c0_5 = arith.constant 0 : index
    %c0_6 = arith.constant 0 : index
    %c0_7 = arith.constant 0 : index
    %2 = vector.load %arg3[%c0_5, %c0_6, %c0_7] : memref<1x8x32xf32, #tpu.memory_space<vmem>>, vector<1x8x32xf32>
    "tpu.trace_start"() <{level = 10 : i32, message = "bqd,bkd->bqk"}> : () -> ()
    %cst = arith.constant dense<0.000000e+00> : vector<1x8x8xf32>
    %3 = tpu.matmul %0, %1, %cst {dimension_numbers = #tpu.dot_dimension_numbers<[2], [2], [1], [1], [0, 0, 0, 1, 1, 1], [0], [0]>} : vector<1x8x32xf32>, vector<1x8x32xf32>, vector<1x8x8xf32> -> vector<1x8x8xf32>
    "tpu.trace_stop"() : () -> ()
    %cst_8 = arith.constant 0.176776692 : f32
    %4 = vector.broadcast %cst_8 : f32 to vector<1x8x8xf32>
    %5 = arith.mulf %3, %4 : vector<1x8x8xf32>
    %cst_9 = arith.constant dense<0xFF800000> : vector<1x8xf32>
    %6 = vector.multi_reduction <maximumf>, %5, %cst_9 [2] : vector<1x8x8xf32> to vector<1x8xf32>
    %7 = vector.shape_cast %6 : vector<1x8xf32> to vector<1x8x1xf32>
    %8 = vector.broadcast %7 : vector<1x8x1xf32> to vector<1x8x8xf32>
    %9 = arith.subf %5, %8 : vector<1x8x8xf32>
    %10 = math.exp %9 : vector<1x8x8xf32>
    %cst_10 = arith.constant dense<0.000000e+00> : vector<1x8xf32>
    %11 = vector.multi_reduction <add>, %10, %cst_10 [2] : vector<1x8x8xf32> to vector<1x8xf32>
    %12 = vector.shape_cast %11 : vector<1x8xf32> to vector<1x8x1xf32>
    %13 = vector.broadcast %12 : vector<1x8x1xf32> to vector<1x8x8xf32>
    %14 = arith.divf %10, %13 : vector<1x8x8xf32>
    %c0_11 = arith.constant 0 : index
    %c0_12 = arith.constant 0 : index
    %c0_13 = arith.constant 0 : index
    %15 = vector.load %arg5[%c0_11, %c0_12, %c0_13] : memref<1x8x8xf32, #tpu.memory_space<vmem>>, vector<1x8x8xf32>
    tpu.vector_store %arg5[%c0_11, %c0_12, %c0_13], %14 {strides = array<i32>} : memref<1x8x8xf32, #tpu.memory_space<vmem>>, vector<1x8x8xf32>,
    "tpu.trace_start"() <{level = 10 : i32, message = "bqk,bkd->bqd"}> : () -> ()
    %cst_14 = arith.constant dense<0.000000e+00> : vector<1x8x32xf32>
    %16 = tpu.matmul %14, %2, %cst_14 {dimension_numbers = #tpu.dot_dimension_numbers<[2], [1], [1], [2], [0, 0, 0, 1, 1, 2], [0], [0]>} : vector<1x8x8xf32>, vector<1x8x32xf32>, vector<1x8x32xf32> -> vector<1x8x32xf32>
    "tpu.trace_stop"() : () -> ()
    %c0_15 = arith.constant 0 : index
    %c0_16 = arith.constant 0 : index
    %c0_17 = arith.constant 0 : index
    %17 = vector.load %arg4[%c0_15, %c0_16, %c0_17] : memref<1x8x32xf32, #tpu.memory_space<vmem>>, vector<1x8x32xf32>
    tpu.vector_store %arg4[%c0_15, %c0_16, %c0_17], %16 {strides = array<i32>} : memref<1x8x32xf32, #tpu.memory_space<vmem>>, vector<1x8x32xf32>,
    return
  }
  func.func @transform_0(%arg0: i32) -> (i32, i32, i32) {
    %c0_i32 = arith.constant 0 : i32
    %c0_i32_0 = arith.constant 0 : i32
    %c0_i32_1 = arith.constant 0 : i32
    return %arg0, %c0_i32, %c0_i32_0 : i32, i32, i32
  }
  func.func @transform_1(%arg0: i32) -> (i32, i32, i32) {
    %c0_i32 = arith.constant 0 : i32
    %c0_i32_0 = arith.constant 0 : i32
    %c0_i32_1 = arith.constant 0 : i32
    return %arg0, %c0_i32, %c0_i32_0 : i32, i32, i32
  }
  func.func @transform_2(%arg0: i32) -> (i32, i32, i32) {
    %c0_i32 = arith.constant 0 : i32
    %c0_i32_0 = arith.constant 0 : i32
    %c0_i32_1 = arith.constant 0 : i32
    return %arg0, %c0_i32, %c0_i32_0 : i32, i32, i32
  }
  func.func @transform_3(%arg0: i32) -> (i32, i32, i32) {
    %c0_i32 = arith.constant 0 : i32
    %c0_i32_0 = arith.constant 0 : i32
    %c0_i32_1 = arith.constant 0 : i32
    return %arg0, %c0_i32, %c0_i32_0 : i32, i32, i32
  }
  func.func @transform_4(%arg0: i32) -> (i32, i32, i32) {
    %c0_i32 = arith.constant 0 : i32
    %c0_i32_0 = arith.constant 0 : i32
    %c0_i32_1 = arith.constant 0 : i32
    return %arg0, %c0_i32, %c0_i32_0 : i32, i32, i32
  }
}

</mosaic_0001>

<llo_original>
// kernel: tpu_custom_call.1
$region0: #{tpu_custom_call.1}
  #allocation0 [shape = 'u32[]', space=smem, size = 0x4, offset = 0x4, fixed_abs, tag = 'smem constant byte address 0x4 - core index']
  #allocation1 [shape = 'u32[144,128]{1,0:T(1,128)}', space=vmem, size = 0x12000, scoped, tag = 'internal scratch']
  %s0 = inlined_call_operand.hbm [shape: f32[2,8,32], index: 0, kind: input, shape index: {}]
  %s1 = inlined_call_operand.hbm [shape: f32[2,8,32], index: 1, kind: input, shape index: {}]
  %s2 = inlined_call_operand.hbm [shape: f32[2,8,32], index: 2, kind: input, shape index: {}]
  %s3 = inlined_call_operand.hbm [shape: f32[2,8,32], index: 3, kind: output, shape index: {0}]
  %s4 = inlined_call_operand.hbm [shape: f32[2,8,8], index: 4, kind: output, shape index: {1}]
  %5 = xla_tuple %s3, %s4
  %s6 = sld [smem:[#allocation0]]
  $region65: #{tpu_custom_call.1} parent=0
    _
  %s8 = ssub.s32 1, %s6
  %s9 = scalar_select 0, %s8, %s6
  $region1: #{tpu_custom_call.1} parent=0
    #allocation2 [shape = 'u8[8192]{0}', space=vmem, size = 0x2000, scoped, tag = 'input window, operand 0']
    #allocation3 [shape = 's32[2]{0}', space=sflag, size = 0x8, scoped, tag = 'scoped memory for tpu_custom_call.1']
    #allocation4 [shape = 's32[2]{0}', space=sflag, size = 0x8, scoped, tag = 'scoped memory for tpu_custom_call.1']
    #allocation5 [shape = 'u8[8192]{0}', space=vmem, size = 0x2000, scoped, tag = 'input window, operand 1']
    #allocation6 [shape = 's32[2]{0}', space=sflag, size = 0x8, scoped, tag = 'scoped memory for tpu_custom_call.1']
    #allocation7 [shape = 'u8[8192]{0}', space=vmem, size = 0x2000, scoped, tag = 'input window, operand 2']
    #allocation8 [shape = 'u8[8192]{0}', space=vmem, size = 0x2000, scoped, tag = 'output window, operand 0']
    #allocation9 [shape = 'u8[8192]{0}', space=vmem, size = 0x2000, scoped, tag = 'output window, operand 1']
    #allocation10 [shape = 's32[2]{0}', space=sflag, size = 0x8, scoped, tag = 'scoped memory for tpu_custom_call.1']
    %10 = vsyncpa [#allocation3], 0
    %s11 = scalar_lea.sflag [#allocation3], 1
    %12 = vsyncpa %s11, 0
    %13 = vsyncpa [#allocation6], 0
    %s14 = scalar_lea.sflag [#allocation6], 1
    %15 = vsyncpa %s14, 0
    %16 = vsyncpa [#allocation4], 0
    %s17 = scalar_lea.sflag [#allocation4], 1
    %18 = vsyncpa %s17, 0
    %19 = vsyncpa [#allocation10], 0
    %s20 = scalar_lea.sflag [#allocation10], 1
    %21 = vsyncpa %s20, 0
    loop: start=0, step=1, limit=4
    $region2: #{tpu_custom_call.1} parent=1 // loop_pre_header
      _
    $region3: #{tpu_custom_call.1} parent=1 // loop_header
      %s23 = sphi 0, %s27
      %p24 = scmp.ge.s32.totalorder %s23, 4
      %s33 = sphi 0, %s35
      %s36 = sphi 0, %s33
      %s37 = sphi 0, %s36
      %s53 = sphi 0, %s37
      %s59 = sphi 0, %s61
      %s62 = sphi 0, %s59
      %s63 = sphi 0, %s62
      %s79 = sphi 0, %s63
      %s85 = sphi 0, %s87
      %s88 = sphi 0, %s85
      %s89 = sphi 0, %s88
      %s105 = sphi 0, %s89
      %s111 = sphi 0, %s113
      %s114 = sphi 0, %s111
      %s115 = sphi 0, %s114
      %s131 = sphi 0, %s115
      %s137 = sphi 0, %s139
      %s140 = sphi 0, %s137
      %s141 = sphi 0, %s140
      %s157 = sphi 0, %s141
    $region4: #{tpu_custom_call.1} parent=1 // loop_header_branch
      %26 = sbr.rel (%p24) target = $region8
    $region5: #{tpu_custom_call.1} parent=1 // loop_body
      %s28 = ssub.s32 %s23, 1
      %s29 = ssub.s32 %s23, 2
      %s30 = sadd.s32 %s23, 1
      %s31 = ssub.s32 %s23, %s30
      %p32 = scmp.eq.s32.totalorder %s31, 0
      %s34 = sadd.s32 %s33, 1
      %s35 = scalar_select %p32, %s33, %s34
      %p38 = pneg %p32
      %p39 = scmp.eq.s32.totalorder %s23, 1
      %p40 = por %p38, %p39
      %p41 = scmp.ne.s32.totalorder %s33, %s36
      %p42 = scmp.eq.s32.totalorder %s23, 0
      %p43 = por %p41, %p42
      %p44 = scmp.ne.s32.totalorder %s33, %s36
      %p45 = scmp.eq.s32.totalorder %s28, 1
      %p46 = por %p44, %p45
      %p47 = scmp.ne.s32.totalorder %s36, %s37
      %p48 = scmp.eq.s32.totalorder %s28, 0
      %p49 = por %p47, %p48
      %p50 = scmp.ne.s32.totalorder %s36, %s37
      %p51 = scmp.eq.s32.totalorder %s29, 1
      %p52 = por %p50, %p51
      %p54 = scmp.ne.s32.totalorder %s37, %s53
      %p55 = scmp.eq.s32.totalorder %s29, 0
      %p56 = por %p54, %p55
      %s57 = ssub.s32 %s23, %s30
      %p58 = scmp.eq.s32.totalorder %s57, 0
      %s60 = sadd.s32 %s59, 1
      %s61 = scalar_select %p58, %s59, %s60
      %p64 = pneg %p58
      %p65 = scmp.eq.s32.totalorder %s23, 1
      %p66 = por %p64, %p65
      %p67 = scmp.ne.s32.totalorder %s59, %s62
      %p68 = scmp.eq.s32.totalorder %s23, 0
      %p69 = por %p67, %p68
      %p70 = scmp.ne.s32.totalorder %s59, %s62
      %p71 = scmp.eq.s32.totalorder %s28, 1
      %p72 = por %p70, %p71
      %p73 = scmp.ne.s32.totalorder %s62, %s63
      %p74 = scmp.eq.s32.totalorder %s28, 0
      %p75 = por %p73, %p74
      %p76 = scmp.ne.s32.totalorder %s62, %s63
      %p77 = scmp.eq.s32.totalorder %s29, 1
      %p78 = por %p76, %p77
      %p80 = scmp.ne.s32.totalorder %s63, %s79
      %p81 = scmp.eq.s32.totalorder %s29, 0
      %p82 = por %p80, %p81
      %s83 = ssub.s32 %s23, %s30
      %p84 = scmp.eq.s32.totalorder %s83, 0
      %s86 = sadd.s32 %s85, 1
      %s87 = scalar_select %p84, %s85, %s86
      %p90 = pneg %p84
      %p91 = scmp.eq.s32.totalorder %s23, 1
      %p92 = por %p90, %p91
      %p93 = scmp.ne.s32.totalorder %s85, %s88
      %p94 = scmp.eq.s32.totalorder %s23, 0
      %p95 = por %p93, %p94
      %p96 = scmp.ne.s32.totalorder %s85, %s88
      %p97 = scmp.eq.s32.totalorder %s28, 1
      %p98 = por %p96, %p97
      %p99 = scmp.ne.s32.totalorder %s88, %s89
      %p100 = scmp.eq.s32.totalorder %s28, 0
      %p101 = por %p99, %p100
      %p102 = scmp.ne.s32.totalorder %s88, %s89
      %p103 = scmp.eq.s32.totalorder %s29, 1
      %p104 = por %p102, %p103
      %p106 = scmp.ne.s32.totalorder %s89, %s105
      %p107 = scmp.eq.s32.totalorder %s29, 0
      %p108 = por %p106, %p107
      %s109 = ssub.s32 %s23, %s30
      %p110 = scmp.eq.s32.totalorder %s109, 0
      %s112 = sadd.s32 %s111, 1
      %s113 = scalar_select %p110, %s111, %s112
      %p116 = pneg %p110
      %p117 = scmp.eq.s32.totalorder %s23, 1
      %p118 = por %p116, %p117
      %p119 = scmp.ne.s32.totalorder %s111, %s114
      %p120 = scmp.eq.s32.totalorder %s23, 0
      %p121 = por %p119, %p120
      %p122 = scmp.ne.s32.totalorder %s111, %s114
      %p123 = scmp.eq.s32.totalorder %s28, 1
      %p124 = por %p122, %p123
      %p125 = scmp.ne.s32.totalorder %s114, %s115
      %p126 = scmp.eq.s32.totalorder %s28, 0
      %p127 = por %p125, %p126
      %p128 = scmp.ne.s32.totalorder %s114, %s115
      %p129 = scmp.eq.s32.totalorder %s29, 1
      %p130 = por %p128, %p129
      %p132 = scmp.ne.s32.totalorder %s115, %s131
      %p133 = scmp.eq.s32.totalorder %s29, 0
      %p134 = por %p132, %p133
      %s135 = ssub.s32 %s23, %s30
      %p136 = scmp.eq.s32.totalorder %s135, 0
      %s138 = sadd.s32 %s137, 1
      %s139 = scalar_select %p136, %s137, %s138
      %p142 = pneg %p136
      %p143 = scmp.eq.s32.totalorder %s23, 1
      %p144 = por %p142, %p143
      %p145 = scmp.ne.s32.totalorder %s137, %s140
      %p146 = scmp.eq.s32.totalorder %s23, 0
      %p147 = por %p145, %p146
      %p148 = scmp.ne.s32.totalorder %s137, %s140
      %p149 = scmp.eq.s32.totalorder %s28, 1
      %p150 = por %p148, %p149
      %p151 = scmp.ne.s32.totalorder %s140, %s141
      %p152 = scmp.eq.s32.totalorder %s28, 0
      %p153 = por %p151, %p152
      %p154 = scmp.ne.s32.totalorder %s140, %s141
      %p155 = scmp.eq.s32.totalorder %s29, 1
      %p156 = por %p154, %p155
      %p158 = scmp.ne.s32.totalorder %s141, %s157
      %p159 = scmp.eq.s32.totalorder %s29, 0
      %p160 = por %p158, %p159
      %p161 = scmp.le.s32.totalorder 1, %s23
      %p162 = scmp.lt.s32.totalorder %s23, 3
      %p163 = pnand %p161, %p162
      %p164 = pneg %p163
      // Predicated region
      $region9: #{tpu_custom_call.1} parent=5 // pred_check
        _
      $region10: #{tpu_custom_call.1} parent=5 // pred_check_branch
        %166 = sbr.rel (%p163) target = $region12
      $region11: #{tpu_custom_call.1} parent=5 // pred_region
        %s167 = ssub.s32 %s23, 1
      $region12: #{tpu_custom_call.1} parent=5 // pred_fallthru
        _
      %p168 = scmp.lt.s32.totalorder %s23, 2
      // Predicated region
      $region13: #{tpu_custom_call.1} parent=5 // pred_check
        %p169 = pneg %p168
      $region14: #{tpu_custom_call.1} parent=5 // pred_check_branch
        %171 = sbr.rel (%p169) target = $region16
      $region15: #{tpu_custom_call.1} parent=5 // pred_region
        // Predicated region
        $region17: #{tpu_custom_call.1} parent=15 // pred_check
          %p172 = pneg %p43
        $region18: #{tpu_custom_call.1} parent=15 // pred_check_branch
          %174 = sbr.rel (%p172) target = $region20
        $region19: #{tpu_custom_call.1} parent=15 // pred_region
          %s175 = sand.u32 %s33, 1
          %s176 = scalar_lea.sflag [#allocation3], %s175
          %s177 = sand.u32 %s33, 1
          %s178 = smul.addr %s177, 8
          %s179 = scalar_lea.vmem [#allocation2], %s178
          %s181 = ssub.s32 128, 128
          %182 = vsyncadd %s176, %s181
          %s183 = smul.addr %s23, 128
          %s184 = scalar_lea.hbm %s0, %s183
          %s186 = sshll.u32 %s179, 4
          %s187 = int_to_ptr.vmem [resolvable:$true] %s186
          %189 = dma.hbm_to_vmem [thread:$0]  %s184, 128, %s187, %s176
        $region20: #{tpu_custom_call.1} parent=15 // pred_fallthru
          _
        // Predicated region
        $region21: #{tpu_custom_call.1} parent=15 // pred_check
          %p190 = pneg %p69
        $region22: #{tpu_custom_call.1} parent=15 // pred_check_branch
          %192 = sbr.rel (%p190) target = $region24
        $region23: #{tpu_custom_call.1} parent=15 // pred_region
          %s193 = sand.u32 %s23, 1
          %s194 = scalar_lea.sflag [#allocation6], %s193
          %s195 = sand.u32 %s59, 1
          %s196 = smul.addr %s195, 8
          %s197 = scalar_lea.vmem [#allocation5], %s196
          %s199 = ssub.s32 128, 128
          %200 = vsyncadd %s194, %s199
          %s201 = smul.addr %s23, 128
          %s202 = scalar_lea.hbm %s1, %s201
          %s204 = sshll.u32 %s197, 4
          %s205 = int_to_ptr.vmem [resolvable:$true] %s204
          %207 = dma.hbm_to_vmem [thread:$0]  %s202, 128, %s205, %s194
        $region24: #{tpu_custom_call.1} parent=15 // pred_fallthru
          _
        // Predicated region
        $region25: #{tpu_custom_call.1} parent=15 // pred_check
          %p208 = pneg %p95
        $region26: #{tpu_custom_call.1} parent=15 // pred_check_branch
          %210 = sbr.rel (%p208) target = $region28
        $region27: #{tpu_custom_call.1} parent=15 // pred_region
          %s211 = sand.u32 %s23, 1
          %s212 = scalar_lea.sflag [#allocation6], %s211
          %s213 = sand.u32 %s85, 1
          %s214 = smul.addr %s213, 8
          %s215 = scalar_lea.vmem [#allocation7], %s214
          %s217 = ssub.s32 128, 128
          %218 = vsyncadd %s212, %s217
          %s219 = smul.addr %s23, 128
          %s220 = scalar_lea.hbm %s2, %s219
          %s222 = sshll.u32 %s215, 4
          %s223 = int_to_ptr.vmem [resolvable:$true] %s222
          %225 = dma.hbm_to_vmem [thread:$0]  %s220, 128, %s223, %s212
        $region28: #{tpu_custom_call.1} parent=15 // pred_fallthru
          _
      $region16: #{tpu_custom_call.1} parent=5 // pred_fallthru
        _
      %p226 = scmp.le.s32.totalorder 1, %s23
      %p227 = scmp.lt.s32.totalorder %s23, 3
      %p228 = pnand %p226, %p227
      %p229 = pneg %p228
      // Predicated region
      $region29: #{tpu_custom_call.1} parent=5 // pred_check
        _
      $region30: #{tpu_custom_call.1} parent=5 // pred_check_branch
        %231 = sbr.rel (%p228) target = $region32
      $region31: #{tpu_custom_call.1} parent=5 // pred_region
        %s232 = ssub.s32 %s23, 1
        %s233 = sand.u32 %s36, 1
        %s234 = scalar_lea.sflag [#allocation3], %s233
        %s235 = sand.u32 %s36, 1
        %s236 = smul.addr %s235, 8
        %s237 = scalar_lea.vmem [#allocation2], %s236
        // Predicated region
        $region33: #{tpu_custom_call.1} parent=31 // pred_check
          %p238 = pneg %p49
        $region34: #{tpu_custom_call.1} parent=31 // pred_check_branch
          %240 = sbr.rel (%p238) target = $region36
        $region35: #{tpu_custom_call.1} parent=31 // pred_region
          %241 = dma.done %s234, 128
        $region36: #{tpu_custom_call.1} parent=31 // pred_fallthru
          _
        %s242 = sand.u32 %s28, 1
        %s243 = scalar_lea.sflag [#allocation6], %s242
        %s244 = sand.u32 %s62, 1
        %s245 = smul.addr %s244, 8
        %s246 = scalar_lea.vmem [#allocation5], %s245
        // Predicated region
        $region37: #{tpu_custom_call.1} parent=31 // pred_check
          %p247 = pneg %p75
        $region38: #{tpu_custom_call.1} parent=31 // pred_check_branch
          %249 = sbr.rel (%p247) target = $region40
        $region39: #{tpu_custom_call.1} parent=31 // pred_region
          %250 = dma.done %s243, 128
        $region40: #{tpu_custom_call.1} parent=31 // pred_fallthru
          _
        %s251 = sand.u32 %s28, 1
        %s252 = scalar_lea.sflag [#allocation6], %s251
        %s253 = sand.u32 %s88, 1
        %s254 = smul.addr %s253, 8
        %s255 = scalar_lea.vmem [#allocation7], %s254
        // Predicated region
        $region41: #{tpu_custom_call.1} parent=31 // pred_check
          %p256 = pneg %p101
        $region42: #{tpu_custom_call.1} parent=31 // pred_check_branch
          %258 = sbr.rel (%p256) target = $region44
        $region43: #{tpu_custom_call.1} parent=31 // pred_region
          %259 = dma.done %s252, 128
        $region44: #{tpu_custom_call.1} parent=31 // pred_fallthru
          _
        %s260 = sand.u32 %s36, 1
        %s261 = scalar_lea.sflag [#allocation3], %s260
        %s262 = sand.u32 %s36, 1
        %s263 = smul.addr %s262, 8
        %s264 = scalar_lea.vmem [#allocation2], %s263
        %p265 = pneg %p49
        %p266 = pneg %p46
        %s267 = sand.u32 %s28, 1
        %s268 = scalar_lea.sflag [#allocation6], %s267
        %s269 = sand.u32 %s62, 1
        %s270 = smul.addr %s269, 8
        %s271 = scalar_lea.vmem [#allocation5], %s270
        %p272 = pneg %p75
        %p273 = pneg %p72
        %s274 = sand.u32 %s28, 1
        %s275 = scalar_lea.sflag [#allocation6], %s274
        %s276 = sand.u32 %s88, 1
        %s277 = smul.addr %s276, 8
        %s278 = scalar_lea.vmem [#allocation7], %s277
        %p279 = pneg %p101
        %p280 = pneg %p98
        %p281 = pneg %p127
        %p282 = pneg %p124
        %s283 = sand.u32 %s114, 1
        %s284 = scalar_lea.sflag [#allocation4], %s283
        %s285 = sand.u32 %s114, 1
        %s286 = smul.addr %s285, 8
        %s287 = scalar_lea.vmem [#allocation8], %s286
        %p288 = pneg %p153
        %p289 = pneg %p150
        %s290 = sand.u32 %s140, 1
        %s291 = scalar_lea.sflag [#allocation10], %s290
        %s292 = sand.u32 %s140, 1
        %s293 = smul.addr %s292, 8
        %s294 = scalar_lea.vmem [#allocation9], %s293
        %v295 = vld [vmem:[%s237] sm:$0xff]
        %v296 = vld [vmem:[%s246] sm:$0xff]
        %v297 = vld [vmem:[%s255] sm:$0xff]
        %vm298 = vcmask 261120
        %v300 = vsel %vm298, %v295, 0
        %v303 = vsel %vm298, %v296, 0
        %305 = vmatprep.subr.mxu0 0.0
        %306 = vmatpush1.xpose.msra.mxu0 %v303
        %307 = vmatprep.subr.mxu0 0.0
        %308 = vmatpush1.xpose.msra.mxu0 0.0
        %309 = vmatprep.subr.mxu0 0.0
        %310 = vmatpush1.xpose.msra.mxu0 0.0
        %311 = vmatprep.subr.mxu0 0.0
        %312 = vmatpush1.xpose.msra.mxu0 0.0
        %313 = vmatprep.subr.mxu0 0.0
        %314 = vmatpush1.xpose.msra.mxu0 0.0
        %315 = vmatprep.subr.mxu0 0.0
        %316 = vmatpush1.xpose.msra.mxu0 0.0
        %317 = vmatprep.subr.mxu0 0.0
        %318 = vmatpush1.xpose.msra.mxu0 0.0
        %319 = vmatprep.subr.mxu0 0.0
        %320 = vmatpush1.xpose.msra.mxu0 0.0
        %321 = vmatprep.subr.mxu0 0.0
        %322 = vmatpush1.xpose.msra.mxu0 0.0
        %323 = vmatprep.subr.mxu0 0.0
        %324 = vmatpush1.xpose.msra.mxu0 0.0
        %325 = vmatprep.subr.mxu0 0.0
        %326 = vmatpush1.xpose.msra.mxu0 0.0
        %327 = vmatprep.subr.mxu0 0.0
        %328 = vmatpush1.xpose.msra.mxu0 0.0
        %329 = vmatprep.subr.mxu0 0.0
        %330 = vmatpush1.xpose.msra.mxu0 0.0
        %331 = vmatprep.subr.mxu0 0.0
        %332 = vmatpush1.xpose.msra.mxu0 0.0
        %333 = vmatprep.subr.mxu0 0.0
        %334 = vmatpush1.xpose.msra.mxu0 0.0
        %335 = vmatprep.subr.mxu0 0.0
        %336 = vmatpush1.xpose.msra.mxu0 0.0
        %337 = vmatprep.subr.mxu0 0.0
        %338 = vmatpush1.xpose.msra.mxu0 0.0
        %339 = vmatprep.subr.mxu0 0.0
        %340 = vmatpush1.xpose.msra.mxu0 0.0
        %341 = vmatprep.subr.mxu0 0.0
        %342 = vmatpush1.xpose.msra.mxu0 0.0
        %343 = vmatprep.subr.mxu0 0.0
        %344 = vmatpush1.xpose.msra.mxu0 0.0
        %345 = vmatprep.subr.mxu0 0.0
        %346 = vmatpush1.xpose.msra.mxu0 0.0
        %347 = vmatprep.subr.mxu0 0.0
        %348 = vmatpush1.xpose.msra.mxu0 0.0
        %349 = vmatprep.subr.mxu0 0.0
        %350 = vmatpush1.xpose.msra.mxu0 0.0
        %351 = vmatprep.subr.mxu0 0.0
        %352 = vmatpush1.xpose.msra.mxu0 0.0
        %353 = vmatprep.subr.mxu0 0.0
        %354 = vmatpush1.xpose.msra.mxu0 0.0
        %355 = vmatprep.subr.mxu0 0.0
        %356 = vmatpush1.xpose.msra.mxu0 0.0
        %357 = vmatprep.subr.mxu0 0.0
        %358 = vmatpush1.xpose.msra.mxu0 0.0
        %359 = vmatprep.subr.mxu0 0.0
        %360 = vmatpush1.xpose.msra.mxu0 0.0
        %361 = vmatprep.subr.mxu0 0.0
        %362 = vmatpush1.xpose.msra.mxu0 0.0
        %363 = vmatprep.subr.mxu0 0.0
        %364 = vmatpush1.xpose.msra.mxu0 0.0
        %365 = vmatprep.subr.mxu0 0.0
        %366 = vmatpush1.xpose.msra.mxu0 0.0
        %367 = vmatprep.subr.mxu0 0.0
        %368 = vmatpush1.xpose.msra.mxu0 0.0
        %369 = vmatprep.mubr.f32.mxu0 0.0
        %370 = vmatmul.mubr.f32.gmra.mrb[0].mxu0 %v300
        %v371 = vpop.f32.mrb[0].mxu0
        %v372 = vadd.f32 0.0, %v371
        %v373 = vpop.f32.mrb[0].mxu0
        %374 = vdwg.mxu0
        %v375 = vmul.f32 %v372, 0.17677669
        %vm376 = vcmask 64512
        %v377 = vsel %vm376, %v375, -inf
        %378 = vmax.xlane.f32.xlu0 %v377
        %v379 = vpop.xlane.xlu0 %378
        %v380 = vsub.f32 %v375, %v379
        %v381 = vmul.f32 %v380, 1.442695
        %v382 = vpow.pop %v381
        %v383 = vsel %vm376, %v382, 0.0
        %384 = vadd.xlane.f32.xlu0 %v383
        %v385 = vpop.xlane.xlu0 %384
        %v386 = vrcp.pop %v385
        %v387 = vmul.f32 %v382, %v386
        %388 = vst.msk [vmem:[%s294] sm:$0xff] %vm376, %v387
        %v390 = vsel %vm376, %v387, 0
        %392 = vmatprep.subr.mxu0 0.0
        %393 = vmatpush1.msra.mxu0 %v297
        %394 = vmatprep.subr.mxu0 0.0
        %395 = vmatpush1.msra.mxu0 0.0
        %396 = vmatprep.subr.mxu0 0.0
        %397 = vmatpush1.msra.mxu0 0.0
        %398 = vmatprep.subr.mxu0 0.0
        %399 = vmatpush1.msra.mxu0 0.0
        %400 = vmatprep.subr.mxu0 0.0
        %401 = vmatpush1.msra.mxu0 0.0
        %402 = vmatprep.subr.mxu0 0.0
        %403 = vmatpush1.msra.mxu0 0.0
        %404 = vmatprep.subr.mxu0 0.0
        %405 = vmatpush1.msra.mxu0 0.0
        %406 = vmatprep.subr.mxu0 0.0
        %407 = vmatpush1.msra.mxu0 0.0
        %408 = vmatprep.subr.mxu0 0.0
        %409 = vmatpush1.msra.mxu0 0.0
        %410 = vmatprep.subr.mxu0 0.0
        %411 = vmatpush1.msra.mxu0 0.0
        %412 = vmatprep.subr.mxu0 0.0
        %413 = vmatpush1.msra.mxu0 0.0
        %414 = vmatprep.subr.mxu0 0.0
        %415 = vmatpush1.msra.mxu0 0.0
        %416 = vmatprep.subr.mxu0 0.0
        %417 = vmatpush1.msra.mxu0 0.0
        %418 = vmatprep.subr.mxu0 0.0
        %419 = vmatpush1.msra.mxu0 0.0
        %420 = vmatprep.subr.mxu0 0.0
        %421 = vmatpush1.msra.mxu0 0.0
        %422 = vmatprep.subr.mxu0 0.0
        %423 = vmatpush1.msra.mxu0 0.0
        %424 = vmatprep.subr.mxu0 0.0
        %425 = vmatpush1.msra.mxu0 0.0
        %426 = vmatprep.subr.mxu0 0.0
        %427 = vmatpush1.msra.mxu0 0.0
        %428 = vmatprep.subr.mxu0 0.0
        %429 = vmatpush1.msra.mxu0 0.0
        %430 = vmatprep.subr.mxu0 0.0
        %431 = vmatpush1.msra.mxu0 0.0
        %432 = vmatprep.subr.mxu0 0.0
        %433 = vmatpush1.msra.mxu0 0.0
        %434 = vmatprep.subr.mxu0 0.0
        %435 = vmatpush1.msra.mxu0 0.0
        %436 = vmatprep.subr.mxu0 0.0
        %437 = vmatpush1.msra.mxu0 0.0
        %438 = vmatprep.subr.mxu0 0.0
        %439 = vmatpush1.msra.mxu0 0.0
        %440 = vmatprep.subr.mxu0 0.0
        %441 = vmatpush1.msra.mxu0 0.0
        %442 = vmatprep.subr.mxu0 0.0
        %443 = vmatpush1.msra.mxu0 0.0
        %444 = vmatprep.subr.mxu0 0.0
        %445 = vmatpush1.msra.mxu0 0.0
        %446 = vmatprep.subr.mxu0 0.0
        %447 = vmatpush1.msra.mxu0 0.0
        %448 = vmatprep.subr.mxu0 0.0
        %449 = vmatpush1.msra.mxu0 0.0
        %450 = vmatprep.subr.mxu0 0.0
        %451 = vmatpush1.msra.mxu0 0.0
        %452 = vmatprep.subr.mxu0 0.0
        %453 = vmatpush1.msra.mxu0 0.0
        %454 = vmatprep.subr.mxu0 0.0
        %455 = vmatpush1.msra.mxu0 0.0
        %456 = vmatprep.mubr.f32.mxu0 0.0
        %457 = vmatmul.mubr.f32.gmra.mrb[0].mxu0 %v390
        %v458 = vpop.f32.mrb[0].mxu0
        %v459 = vadd.f32 0.0, %v458
        %v460 = vpop.f32.mrb[0].mxu0
        %461 = vdwg.mxu0
        %462 = vst.msk [vmem:[%s287] sm:$0xff] %vm298, %v459
        %s463 = sand.u32 %s114, 1
        %s464 = scalar_lea.sflag [#allocation4], %s463
        %s465 = sand.u32 %s114, 1
        %s466 = smul.addr %s465, 8
        %s467 = scalar_lea.vmem [#allocation8], %s466
        %s468 = sand.u32 %s140, 1
        %s469 = scalar_lea.sflag [#allocation10], %s468
        %s470 = sand.u32 %s140, 1
        %s471 = smul.addr %s470, 8
        %s472 = scalar_lea.vmem [#allocation9], %s471
        // Predicated region
        $region45: #{tpu_custom_call.1} parent=31 // pred_check
          %p473 = pneg %p124
        $region46: #{tpu_custom_call.1} parent=31 // pred_check_branch
          %475 = sbr.rel (%p473) target = $region48
        $region47: #{tpu_custom_call.1} parent=31 // pred_region
          %s477 = ssub.s32 128, 128
          %478 = vsyncadd %s464, %s477
          %s479 = smul.addr %s28, 128
          %s480 = scalar_lea.hbm %s3, %s479
          %s482 = sshll.u32 %s467, 4
          %s483 = int_to_ptr.vmem [resolvable:$true] %s482
          %485 = dma.vmem_to_hbm [thread:$0]  %s483, 128, %s480, %s464
        $region48: #{tpu_custom_call.1} parent=31 // pred_fallthru
          _
        // Predicated region
        $region49: #{tpu_custom_call.1} parent=31 // pred_check
          %p486 = pneg %p150
        $region50: #{tpu_custom_call.1} parent=31 // pred_check_branch
          %488 = sbr.rel (%p486) target = $region52
        $region51: #{tpu_custom_call.1} parent=31 // pred_region
          %s490 = ssub.s32 128, 128
          %491 = vsyncadd %s469, %s490
          %s492 = smul.addr %s28, 128
          %s493 = scalar_lea.hbm %s4, %s492
          %s495 = sshll.u32 %s472, 4
          %s496 = int_to_ptr.vmem [resolvable:$true] %s495
          %498 = dma.vmem_to_hbm [thread:$0]  %s496, 128, %s493, %s469
        $region52: #{tpu_custom_call.1} parent=31 // pred_fallthru
          _
      $region32: #{tpu_custom_call.1} parent=5 // pred_fallthru
        _
      %p499 = scmp.le.s32.totalorder 2, %s23
      // Predicated region
      $region53: #{tpu_custom_call.1} parent=5 // pred_check
        %p500 = pneg %p499
      $region54: #{tpu_custom_call.1} parent=5 // pred_check_branch
        %502 = sbr.rel (%p500) target = $region56
      $region55: #{tpu_custom_call.1} parent=5 // pred_region
        %s503 = ssub.s32 %s23, 2
        // Predicated region
        $region57: #{tpu_custom_call.1} parent=55 // pred_check
          %p504 = pneg %p130
        $region58: #{tpu_custom_call.1} parent=55 // pred_check_branch
          %506 = sbr.rel (%p504) target = $region60
        $region59: #{tpu_custom_call.1} parent=55 // pred_region
          %s507 = sand.u32 %s115, 1
          %s508 = scalar_lea.sflag [#allocation4], %s507
          %s509 = sand.u32 %s115, 1
          %s510 = smul.addr %s509, 8
          %s511 = scalar_lea.vmem [#allocation8], %s510
          %512 = dma.done %s508, 128
        $region60: #{tpu_custom_call.1} parent=55 // pred_fallthru
          _
        // Predicated region
        $region61: #{tpu_custom_call.1} parent=55 // pred_check
          %p513 = pneg %p156
        $region62: #{tpu_custom_call.1} parent=55 // pred_check_branch
          %515 = sbr.rel (%p513) target = $region64
        $region63: #{tpu_custom_call.1} parent=55 // pred_region
          %s516 = sand.u32 %s141, 1
          %s517 = scalar_lea.sflag [#allocation10], %s516
          %s518 = sand.u32 %s141, 1
          %s519 = smul.addr %s518, 8
          %s520 = scalar_lea.vmem [#allocation9], %s519
          %521 = dma.done %s517, 128
        $region64: #{tpu_custom_call.1} parent=55 // pred_fallthru
          _
      $region56: #{tpu_custom_call.1} parent=5 // pred_fallthru
        _
    $region6: #{tpu_custom_call.1} parent=1 // loop_footer
      %s27 = sadd.s32 1, %s23
    $region7: #{tpu_custom_call.1} parent=1 // loop_footer_branch
      %22 = sbr.rel target = $region3
    $region8: #{tpu_custom_call.1} parent=1 // loop_exit
      _
    %522 = vsyncpa [#allocation3], 1
    %s523 = scalar_lea.sflag [#allocation3], 1
    %524 = vsyncpa %s523, 1
    %525 = vsyncpa [#allocation6], 1
    %s526 = scalar_lea.sflag [#allocation6], 1
    %527 = vsyncpa %s526, 1
    %528 = vsyncpa [#allocation4], 1
    %s529 = scalar_lea.sflag [#allocation4], 1
    %530 = vsyncpa %s529, 1
    %531 = vsyncpa [#allocation10], 1
    %s532 = scalar_lea.sflag [#allocation10], 1
    %533 = vsyncpa %s532, 1

</llo_original>
